<compile_context>
chip_gen: v6e
topology: v6e:2x2x1
jax: 0.10.0
libtpu: 0.0.40
codegen_flags: <defaults>
</compile_context>

<pallas_src>
import functools

import jax
import jax.numpy as jnp
from jax.experimental import pallas as pl
from jax.experimental.pallas import tpu as pltpu


def _mlp_kernel(x_ref, w1_ref, b1_ref, w2_ref, b2_ref, w3t_ref, b3t_ref, o_ref):
    # Narrow x to bf16 in-kernel (VPU op hidden under the fill DMA); fp32 accum.
    x = x_ref[...].astype(jnp.bfloat16)                                   # (bb, 25)
    h1 = jnp.dot(x, w1_ref[...], preferred_element_type=jnp.float32) + b1_ref[...]
    h1 = jnp.maximum(h1, 0.0).astype(jnp.bfloat16)                        # (bb, 64)
    h2 = jnp.dot(h1, w2_ref[...], preferred_element_type=jnp.float32) + b2_ref[...]
    h2 = jnp.maximum(h2, 0.0).astype(jnp.bfloat16)                        # (bb, 64)
    # Transposed last layer: out_T[n, m] = sum_k w3t[n, k] * h2[m, k]  -> (4, bb).
    # Batch lands on the 128-lane axis => unmasked, lane-dense stores.
    out_t = jax.lax.dot_general(
        w3t_ref[...], h2,
        dimension_numbers=(((1,), (1,)), ((), ())),
        preferred_element_type=jnp.float32,
    ) + b3t_ref[...]                                                      # (4, bb)
    o_ref[...] = out_t.astype(o_ref.dtype)


def _num_tensorcores():
    """2 on megacore / dual-TC generations (v4, v5p, v7x), else 1."""
    try:
        kind = jax.devices()[0].device_kind.lower()
    except Exception:  # pragma: no cover
        return 1
    return 2 if any(tag in kind for tag in ("v4", "v5p", "v7", "7x")) else 1


def _pick_block_b(B, target=4096):
    """Big tiles amortize the ~0.35us per-grid-step overhead.  Tiles are either
    full-extent (grid of 1) or a multiple of 128 so the transposed (4, block_b)
    output block stays lane-aligned.  Only split into >=2 steps on 2-TC chips."""
    if _num_tensorcores() > 1 and B > 256:
        half = -(-B // 256) * 128            # ceil(B/2) rounded up to 128
        target = min(target, half)
    return B if B <= target else target


@functools.partial(jax.jit, static_argnames=("block_b",))
def _multiclass_forward_p(x, w1, b1, w2, b2, w3t, b3t, *, block_b):
    B, D_in = x.shape
    H1 = w1.shape[1]
    H2 = w2.shape[1]
    D_out = w3t.shape[0]
    grid = (pl.cdiv(B, block_b),)

    flops = 2 * B * (D_in * H1 + H1 * H2 + H2 * D_out)
    bytes_accessed = (
        B * D_in * x.dtype.itemsize          # x read (fp32 straight from caller)
        + B * D_out * 4                      # transposed fp32 output write
        + sum(int(a.size) * a.dtype.itemsize for a in (w1, b1, w2, b2, w3t, b3t))
    )

    def _resident(shape):
        # Constant index_map: parameters are DMA'd once and stay VMEM-resident.
        return pl.BlockSpec(shape, lambda i: (0, 0))

    return pl.pallas_call(
        _mlp_kernel,
        out_shape=jax.ShapeDtypeStruct((D_out, B), jnp.float32),
        grid_spec=pl.GridSpec(
            grid=grid,
            in_specs=[
                pl.BlockSpec((block_b, D_in), lambda i: (i, 0)),   # x batch tile
                _resident(w1.shape), _resident(b1.shape),
                _resident(w2.shape), _resident(b2.shape),
                _resident(w3t.shape), _resident(b3t.shape),
            ],
            out_specs=pl.BlockSpec((D_out, block_b), lambda i: (0, i)),
        ),
        compiler_params=pltpu.CompilerParams(
            dimension_semantics=("parallel",),
            vmem_limit_bytes=32 * 1024 * 1024,
        ),
        cost_estimate=pl.CostEstimate(
            flops=flops, transcendentals=0, bytes_accessed=bytes_accessed
        ),
    )(x, w1, b1, w2, b2, w3t, b3t)


def multiclass_forward(x, w1, b1, w2, b2, w3, b3, *, block_b=None,
                       transposed_output=False):
    """Forward pass of the Multiclass MLP.  x: (B, 25) fp32.  Returns (B, 4) fp32
    logits, or (4, B) when transposed_output=True (skips the final cheap transpose)."""
    B = x.shape[0]
    if block_b is None:
        block_b = _pick_block_b(B)
    # Weight casts are negligible (a few KB); x stays fp32 and is narrowed in-kernel.
    w1b = w1.astype(jnp.bfloat16)
    w2b = w2.astype(jnp.bfloat16)
    w3t = w3.T.astype(jnp.bfloat16)          # (4, 64)
    b3t = jnp.reshape(b3, (-1, 1))           # (4, 1) fp32, lane-broadcast in-kernel
    out_t = _multiclass_forward_p(x, w1b, b1, w2b, b2, w3t, b3t, block_b=block_b)
    return out_t if transposed_output else out_t.T


def init_params(key):
    """Deterministic init mimicking nn.Linear's U(-1/sqrt(fan_in), +1/sqrt(fan_in))."""
    def linear(key, fan_in, fan_out):
        kw, kb = jax.random.split(key)
        bound = 1.0 / jnp.sqrt(fan_in)
        w = jax.random.uniform(kw, (fan_in, fan_out), jnp.float32, -bound, bound)
        b = jax.random.uniform(kb, (1, fan_out), jnp.float32, -bound, bound)
        return w, b

    k1, k2, k3 = jax.random.split(key, 3)
    w1, b1 = linear(k1, 25, 64)
    w2, b2 = linear(k2, 64, 64)
    w3, b3 = linear(k3, 64, 4)
    return w1, b1, w2, b2, w3, b3


def reference_forward(x, w1, b1, w2, b2, w3, b3):
    h1 = jnp.maximum(x @ w1 + b1, 0.0)
    h2 = jnp.maximum(h1 @ w2 + b2, 0.0)
    return h2 @ w3 + b3


if __name__ == "__main__":
    key = jax.random.PRNGKey(0)
    kx, kx2, kx3, kp = jax.random.split(key, 4)
    params = init_params(kp)

    # Small primary check (single full-extent tile path).
    B = 16
    x = jax.random.normal(kx, (B, 25), jnp.float32)
    out = jax.block_until_ready(multiclass_forward(x, *params))
    ref = reference_forward(x, *params)
    assert out.shape == (B, 4), out.shape
    assert jnp.allclose(out, ref, atol=3e-2, rtol=3e-2), "mismatch vs reference (B=16)"

    # Odd batch size, still a single full-extent tile.
    B2 = 37
    x2 = jax.random.normal(kx2, (B2, 25), jnp.float32)
    out2 = jax.block_until_ready(multiclass_forward(x2, *params))
    ref2 = reference_forward(x2, *params)
    assert out2.shape == (B2, 4), out2.shape
    assert jnp.allclose(out2, ref2, atol=3e-2, rtol=3e-2), "mismatch vs reference (B=37)"

    # Multi-step grid with a lane-aligned tile and a masked partial last block.
    B3 = 300
    x3 = jax.random.normal(kx3, (B3, 25), jnp.float32)
    out3 = jax.block_until_ready(multiclass_forward(x3, *params, block_b=128))
    ref3 = reference_forward(x3, *params)
    assert out3.shape == (B3, 4), out3.shape
    assert jnp.allclose(out3, ref3, atol=3e-2, rtol=3e-2), "mismatch vs reference (B=300)"

    print("KERNEL_OK")
</pallas_src>

<mosaic_0001>
module attributes {stable_mosaic.version = 11 : i64} {
  func.func @_mlp_kernel(%arg0: i32, %arg1: memref<16x25xf32, #tpu.memory_space<vmem>>, %arg2: memref<25x64xbf16, #tpu.memory_space<vmem>>, %arg3: memref<1x64xf32, #tpu.memory_space<vmem>>, %arg4: memref<64x64xbf16, #tpu.memory_space<vmem>>, %arg5: memref<1x64xf32, #tpu.memory_space<vmem>>, %arg6: memref<4x64xbf16, #tpu.memory_space<vmem>>, %arg7: memref<4x1xf32, #tpu.memory_space<vmem>>, %arg8: memref<4x16xf32, #tpu.memory_space<vmem>>) attributes {dimension_semantics = [#tpu.dimension_semantics<parallel>], iteration_bounds = array<i64: 1>, scalar_prefetch = 0 : i64, scratch_operands = 0 : i64, tpu.core_type = #tpu.core_type<tc>, window_params = [{transform_indices = @transform_0, window_bounds = array<i64: 16, 25>}, {pipeline_mode = #tpu.pipeline_mode<synchronous>, transform_indices = @transform_1, window_bounds = array<i64: 25, 64>}, {pipeline_mode = #tpu.pipeline_mode<synchronous>, transform_indices = @transform_2, window_bounds = array<i64: 1, 64>}, {pipeline_mode = #tpu.pipeline_mode<synchronous>, transform_indices = @transform_3, window_bounds = array<i64: 64, 64>}, {pipeline_mode = #tpu.pipeline_mode<synchronous>, transform_indices = @transform_4, window_bounds = array<i64: 1, 64>}, {pipeline_mode = #tpu.pipeline_mode<synchronous>, transform_indices = @transform_5, window_bounds = array<i64: 4, 64>}, {pipeline_mode = #tpu.pipeline_mode<synchronous>, transform_indices = @transform_6, window_bounds = array<i64: 4, 1>}, {transform_indices = @transform_7, window_bounds = array<i64: 4, 16>}]} {
    %c0 = arith.constant 0 : index
    %c0_0 = arith.constant 0 : index
    %0 = vector.load %arg1[%c0, %c0_0] : memref<16x25xf32, #tpu.memory_space<vmem>>, vector<16x25xf32>
    %1 = arith.truncf %0 : vector<16x25xf32> to vector<16x25xbf16>
    %c0_1 = arith.constant 0 : index
    %c0_2 = arith.constant 0 : index
    %2 = vector.load %arg2[%c0_1, %c0_2] : memref<25x64xbf16, #tpu.memory_space<vmem>>, vector<25x64xbf16>
    %cst = arith.constant dense<0.000000e+00> : vector<16x64xf32>
    %3 = tpu.matmul %1, %2, %cst {dimension_numbers = #tpu.dot_dimension_numbers<[1], [0], [0], [1], [0, 0, 1, 1], [], []>} : vector<16x25xbf16>, vector<25x64xbf16>, vector<16x64xf32> -> vector<16x64xf32>
    %c0_3 = arith.constant 0 : index
    %c0_4 = arith.constant 0 : index
    %4 = vector.load %arg3[%c0_3, %c0_4] : memref<1x64xf32, #tpu.memory_space<vmem>>, vector<1x64xf32>
    %5 = vector.broadcast %4 : vector<1x64xf32> to vector<16x64xf32>
    %6 = arith.addf %3, %5 : vector<16x64xf32>
    %cst_5 = arith.constant 0.000000e+00 : f32
    %7 = vector.broadcast %cst_5 : f32 to vector<16x64xf32>
    %8 = arith.maximumf %6, %7 : vector<16x64xf32>
    %9 = arith.truncf %8 : vector<16x64xf32> to vector<16x64xbf16>
    %c0_6 = arith.constant 0 : index
    %c0_7 = arith.constant 0 : index
    %10 = vector.load %arg4[%c0_6, %c0_7] : memref<64x64xbf16, #tpu.memory_space<vmem>>, vector<64x64xbf16>
    %cst_8 = arith.constant dense<0.000000e+00> : vector<16x64xf32>
    %11 = tpu.matmul %9, %10, %cst_8 {dimension_numbers = #tpu.dot_dimension_numbers<[1], [0], [0], [1], [0, 0, 1, 1], [], []>} : vector<16x64xbf16>, vector<64x64xbf16>, vector<16x64xf32> -> vector<16x64xf32>
    %c0_9 = arith.constant 0 : index
    %c0_10 = arith.constant 0 : index
    %12 = vector.load %arg5[%c0_9, %c0_10] : memref<1x64xf32, #tpu.memory_space<vmem>>, vector<1x64xf32>
    %13 = vector.broadcast %12 : vector<1x64xf32> to vector<16x64xf32>
    %14 = arith.addf %11, %13 : vector<16x64xf32>
    %cst_11 = arith.constant 0.000000e+00 : f32
    %15 = vector.broadcast %cst_11 : f32 to vector<16x64xf32>
    %16 = arith.maximumf %14, %15 : vector<16x64xf32>
    %17 = arith.truncf %16 : vector<16x64xf32> to vector<16x64xbf16>
    %c0_12 = arith.constant 0 : index
    %c0_13 = arith.constant 0 : index
    %18 = vector.load %arg6[%c0_12, %c0_13] : memref<4x64xbf16, #tpu.memory_space<vmem>>, vector<4x64xbf16>
    %cst_14 = arith.constant dense<0.000000e+00> : vector<4x16xf32>
    %19 = tpu.matmul %18, %17, %cst_14 {dimension_numbers = #tpu.dot_dimension_numbers<[1], [1], [0], [0], [0, 0, 1, 0], [], []>} : vector<4x64xbf16>, vector<16x64xbf16>, vector<4x16xf32> -> vector<4x16xf32>
    %c0_15 = arith.constant 0 : index
    %c0_16 = arith.constant 0 : index
    %20 = vector.load %arg7[%c0_15, %c0_16] : memref<4x1xf32, #tpu.memory_space<vmem>>, vector<4x1xf32>
    %21 = vector.broadcast %20 : vector<4x1xf32> to vector<4x16xf32>
    %22 = arith.addf %19, %21 : vector<4x16xf32>
    %c0_17 = arith.constant 0 : index
    %c0_18 = arith.constant 0 : index
    %23 = vector.load %arg8[%c0_17, %c0_18] : memref<4x16xf32, #tpu.memory_space<vmem>>, vector<4x16xf32>
    tpu.vector_store %arg8[%c0_17, %c0_18], %22 {strides = array<i32>} : memref<4x16xf32, #tpu.memory_space<vmem>>, vector<4x16xf32>,
    return
  }
  func.func @transform_0(%arg0: i32) -> (i32, i32) {
    %c0_i32 = arith.constant 0 : i32
    %c0_i32_0 = arith.constant 0 : i32
    return %arg0, %c0_i32 : i32, i32
  }
  func.func @transform_1(%arg0: i32) -> (i32, i32) {
    %c0_i32 = arith.constant 0 : i32
    %c0_i32_0 = arith.constant 0 : i32
    %c0_i32_1 = arith.constant 0 : i32
    return %c0_i32, %c0_i32_0 : i32, i32
  }
  func.func @transform_2(%arg0: i32) -> (i32, i32) {
    %c0_i32 = arith.constant 0 : i32
    %c0_i32_0 = arith.constant 0 : i32
    %c0_i32_1 = arith.constant 0 : i32
    return %c0_i32, %c0_i32_0 : i32, i32
  }
  func.func @transform_3(%arg0: i32) -> (i32, i32) {
    %c0_i32 = arith.constant 0 : i32
    %c0_i32_0 = arith.constant 0 : i32
    %c0_i32_1 = arith.constant 0 : i32
    return %c0_i32, %c0_i32_0 : i32, i32
  }
  func.func @transform_4(%arg0: i32) -> (i32, i32) {
    %c0_i32 = arith.constant 0 : i32
    %c0_i32_0 = arith.constant 0 : i32
    %c0_i32_1 = arith.constant 0 : i32
    return %c0_i32, %c0_i32_0 : i32, i32
  }
  func.func @transform_5(%arg0: i32) -> (i32, i32) {
    %c0_i32 = arith.constant 0 : i32
    %c0_i32_0 = arith.constant 0 : i32
    %c0_i32_1 = arith.constant 0 : i32
    return %c0_i32, %c0_i32_0 : i32, i32
  }
  func.func @transform_6(%arg0: i32) -> (i32, i32) {
    %c0_i32 = arith.constant 0 : i32
    %c0_i32_0 = arith.constant 0 : i32
    %c0_i32_1 = arith.constant 0 : i32
    return %c0_i32, %c0_i32_0 : i32, i32
  }
  func.func @transform_7(%arg0: i32) -> (i32, i32) {
    %c0_i32 = arith.constant 0 : i32
    %c0_i32_0 = arith.constant 0 : i32
    return %c0_i32, %arg0 : i32, i32
  }
}

</mosaic_0001>

<llo_original>
// kernel: _multiclass_forward_p.1
$region0: #{_multiclass_forward_p.1}
  #allocation0 [shape = 'u32[]', space=smem, size = 0x4, offset = 0x4, fixed_abs, tag = 'smem constant byte address 0x4 - core index']
  #allocation1 [shape = 'u32[144,128]{1,0:T(1,128)}', space=vmem, size = 0x12000, scoped, tag = 'internal scratch']
  %s0 = inlined_call_operand.hbm [shape: f32[16,25], index: 0, kind: input, shape index: {}]
  %s1 = inlined_call_operand.hbm [shape: bf16[25,64], index: 1, kind: input, shape index: {}]
  %s2 = inlined_call_operand.vmem [shape: f32[1,64], index: 2, kind: input, shape index: {}]
  %s3 = inlined_call_operand.hbm [shape: bf16[64,64], index: 3, kind: input, shape index: {}]
  %s4 = inlined_call_operand.vmem [shape: f32[1,64], index: 4, kind: input, shape index: {}]
  %s5 = inlined_call_operand.vmem [shape: bf16[4,64], index: 5, kind: input, shape index: {}]
  %s6 = inlined_call_operand.vmem [shape: f32[4,1], index: 6, kind: input, shape index: {}]
  %s7 = inlined_call_operand.hbm [shape: f32[4,16], index: 7, kind: output, shape index: {}]
  %s8 = sld [smem:[#allocation0]]
  $region50: #{_multiclass_forward_p.1} parent=0
    _
  %s10 = ssub.s32 1, %s8
  %s11 = scalar_select 0, %s10, %s8
  $region1: #{_multiclass_forward_p.1} parent=0
    #allocation2 [shape = 'u8[8192]{0}', space=vmem, size = 0x2000, scoped, tag = 'input window, operand 0, single buffered']
    #allocation3 [shape = 's32[1]{0}', space=sflag, size = 0x4, scoped, tag = 'scoped memory for _multiclass_forward_p.1']
    #allocation4 [shape = 's32[1]{0}', space=sflag, size = 0x4, scoped, tag = 'scoped memory for _multiclass_forward_p.1']
    #allocation5 [shape = 'u8[8192]{0}', space=vmem, size = 0x2000, scoped, tag = 'input window, operand 1, single buffered']
    #allocation6 [shape = 's32[1]{0}', space=sflag, size = 0x4, scoped, tag = 'scoped memory for _multiclass_forward_p.1']
    #allocation7 [shape = 'u8[16384]{0}', space=vmem, size = 0x4000, scoped, tag = 'input window, operand 3, single buffered']
    #allocation8 [shape = 'u8[2048]{0}', space=vmem, size = 0x800, scoped, tag = 'output window, operand 0, single buffered']
    %12 = vsyncpa [#allocation3], 0
    %13 = vsyncpa [#allocation6], 0
    %14 = vsyncpa [#allocation4], 0
    // Predicated region
    $region2: #{_multiclass_forward_p.1} parent=1 // pred_check
      _
    $region3: #{_multiclass_forward_p.1} parent=1 // pred_check_branch
      %16 = sbr.rel (0) target = $region5
    $region4: #{_multiclass_forward_p.1} parent=1 // pred_region
      %s18 = ssub.s32 256, 256
      %19 = vsyncadd [#allocation3], %s18
      %s20 = sshll.u32 [#allocation2], 4
      %s21 = int_to_ptr.vmem [resolvable:$true] %s20
      %26 = dma.hbm_to_vmem [thread:$0]  %s0, 256, %s21, [#allocation3], 128, 128, 8
    $region5: #{_multiclass_forward_p.1} parent=1 // pred_fallthru
      _
    // Predicated region
    $region6: #{_multiclass_forward_p.1} parent=1 // pred_check
      _
    $region7: #{_multiclass_forward_p.1} parent=1 // pred_check_branch
      %28 = sbr.rel (0) target = $region9
    $region8: #{_multiclass_forward_p.1} parent=1 // pred_region
      %s30 = ssub.s32 256, 256
      %31 = vsyncadd [#allocation6], %s30
      %s32 = sshll.u32 [#allocation5], 4
      %s33 = int_to_ptr.vmem [resolvable:$true] %s32
      %38 = dma.hbm_to_vmem [thread:$0]  %s1, 256, %s33, [#allocation6], 64, 64, 4
    $region9: #{_multiclass_forward_p.1} parent=1 // pred_fallthru
      _
    // Predicated region
    $region10: #{_multiclass_forward_p.1} parent=1 // pred_check
      _
    $region11: #{_multiclass_forward_p.1} parent=1 // pred_check_branch
      %40 = sbr.rel (0) target = $region13
    $region12: #{_multiclass_forward_p.1} parent=1 // pred_region
      _
    $region13: #{_multiclass_forward_p.1} parent=1 // pred_fallthru
      _
    // Predicated region
    $region14: #{_multiclass_forward_p.1} parent=1 // pred_check
      _
    $region15: #{_multiclass_forward_p.1} parent=1 // pred_check_branch
      %42 = sbr.rel (0) target = $region17
    $region16: #{_multiclass_forward_p.1} parent=1 // pred_region
      %s44 = ssub.s32 512, 512
      %45 = vsyncadd [#allocation6], %s44
      %s46 = sshll.u32 [#allocation7], 4
      %s47 = int_to_ptr.vmem [resolvable:$true] %s46
      %52 = dma.hbm_to_vmem [thread:$0]  %s3, 512, %s47, [#allocation6], 64, 64, 4
    $region17: #{_multiclass_forward_p.1} parent=1 // pred_fallthru
      _
    // Predicated region
    $region18: #{_multiclass_forward_p.1} parent=1 // pred_check
      _
    $region19: #{_multiclass_forward_p.1} parent=1 // pred_check_branch
      %54 = sbr.rel (0) target = $region21
    $region20: #{_multiclass_forward_p.1} parent=1 // pred_region
      _
    $region21: #{_multiclass_forward_p.1} parent=1 // pred_fallthru
      _
    // Predicated region
    $region22: #{_multiclass_forward_p.1} parent=1 // pred_check
      _
    $region23: #{_multiclass_forward_p.1} parent=1 // pred_check_branch
      %56 = sbr.rel (0) target = $region25
    $region24: #{_multiclass_forward_p.1} parent=1 // pred_region
      _
    $region25: #{_multiclass_forward_p.1} parent=1 // pred_fallthru
      _
    // Predicated region
    $region26: #{_multiclass_forward_p.1} parent=1 // pred_check
      _
    $region27: #{_multiclass_forward_p.1} parent=1 // pred_check_branch
      %58 = sbr.rel (0) target = $region29
    $region28: #{_multiclass_forward_p.1} parent=1 // pred_region
      _
    $region29: #{_multiclass_forward_p.1} parent=1 // pred_fallthru
      _
    // Predicated region
    $region30: #{_multiclass_forward_p.1} parent=1 // pred_check
      _
    $region31: #{_multiclass_forward_p.1} parent=1 // pred_check_branch
      %60 = sbr.rel (0) target = $region33
    $region32: #{_multiclass_forward_p.1} parent=1 // pred_region
      %61 = dma.done [#allocation3], 256
    $region33: #{_multiclass_forward_p.1} parent=1 // pred_fallthru
      _
    // Predicated region
    $region34: #{_multiclass_forward_p.1} parent=1 // pred_check
      _
    $region35: #{_multiclass_forward_p.1} parent=1 // pred_check_branch
      %63 = sbr.rel (0) target = $region37
    $region36: #{_multiclass_forward_p.1} parent=1 // pred_region
      %64 = dma.done [#allocation6], 256
    $region37: #{_multiclass_forward_p.1} parent=1 // pred_fallthru
      _
    // Predicated region
    $region38: #{_multiclass_forward_p.1} parent=1 // pred_check
      _
    $region39: #{_multiclass_forward_p.1} parent=1 // pred_check_branch
      %66 = sbr.rel (0) target = $region41
    $region40: #{_multiclass_forward_p.1} parent=1 // pred_region
      %67 = dma.done [#allocation6], 512
    $region41: #{_multiclass_forward_p.1} parent=1 // pred_fallthru
      _
    %v69 = vld [vmem:[#allocation2] sm:$0xff]
    %v70 = vld [vmem:[#allocation2 + $0x8] sm:$0xff]
    %v71 = vpack.c.bf16 %v70, %v69
    %v72 = vld [vmem:[#allocation5] sm:$0xf]
    %v73 = vld [vmem:[#allocation5 + $0x4] sm:$0xf]
    %v74 = vld [vmem:[#allocation5 + $0x8] sm:$0xf]
    %v75 = vld [vmem:[#allocation5 + $0xc] sm:$0x1]
    %v76 = vld [vmem:[%s2] sm:$0x1]
    %v78 = vlaneseq
    %v79 = vshrl.u32 %v78, 7
    %v80 = vsub.s32 0, %v79
    %v81 = vrot.slane %v76, %v80
    %v87 = vunpack.c.l.b16 %v72
    %v88 = vunpack.c.l.b16 %v73
    %v89 = vunpack.c.l.b16 %v74
    %v90 = vunpack.c.l.b16 %v75
    %v91 = vpack.c.b16 %v88, %v87
    %v92 = vpack.c.b16 %v90, %v89
    %vm94 = vcmask 203776
    %v96 = vsel %vm94, %v71, 0
    %vm98 = vcmask 1043456
    %vm99 = vcmask 1044480
    %v100 = vsel %vm98, 4294967295, 65535
    %v101 = vsel %vm99, %v100, 0
    %v103 = vand.u32 %v92, %v101
    %105 = vmatprep.subr.bf16.mxu0 0
    %106 = vmatpush1.bf16.msra.mxu0 0
    %107 = vmatprep.subr.bf16.mxu0 0
    %108 = vmatpush1.bf16.msra.mxu0 0
    %109 = vmatprep.subr.bf16.mxu0 0
    %110 = vmatpush1.bf16.msra.mxu0 0
    %111 = vmatprep.subr.bf16.mxu0 0
    %112 = vmatpush1.bf16.msra.mxu0 0
    %113 = vmatprep.subr.bf16.mxu0 0
    %114 = vmatpush1.bf16.msra.mxu0 0
    %115 = vmatprep.subr.bf16.mxu0 0
    %116 = vmatpush1.bf16.msra.mxu0 0
    %117 = vmatprep.subr.bf16.mxu0 0
    %118 = vmatpush1.bf16.msra.mxu0 %v103
    %119 = vmatprep.subr.bf16.mxu0 0
    %120 = vmatpush1.bf16.msra.mxu0 %v91
    %121 = vmatprep.subr.bf16.mxu0 0
    %122 = vmatpush2.bf16.msra.mxu0 0
    %123 = vmatprep.subr.bf16.mxu0 0
    %124 = vmatpush2.bf16.msra.mxu0 0
    %125 = vmatprep.subr.bf16.mxu0 0
    %126 = vmatpush2.bf16.msra.mxu0 0
    %127 = vmatprep.subr.bf16.mxu0 0
    %128 = vmatpush2.bf16.msra.mxu0 0
    %129 = vmatprep.subr.bf16.mxu0 0
    %130 = vmatpush2.bf16.msra.mxu0 0
    %131 = vmatprep.subr.bf16.mxu0 0
    %132 = vmatpush2.bf16.msra.mxu0 0
    %133 = vmatprep.subr.bf16.mxu0 0
    %134 = vmatpush2.bf16.msra.mxu0 0
    %135 = vmatprep.subr.bf16.mxu0 0
    %136 = vmatpush2.bf16.msra.mxu0 0
    %137 = vmatprep.mubr.bf16.mxu0 0
    %138 = vmatmul.mubr.bf16.gmra.mxu0 %v96
    %v139 = vpop.f32.mrf.mxu0
    %v140 = vadd.f32 %v81, %v139
    %v141 = vpop.f32.mrf.mxu0
    %v142 = vpop.f32.mrf.mxu0
    %v143 = vadd.f32 %v81, %v142
    %v144 = vpop.f32.mrf.mxu0
    %145 = vdwg.mxu0
    %v146 = vmax.f32 %v140, 0.0
    %v147 = vmax.f32 %v143, 0.0
    %v148 = vpack.c.bf16 %v147, %v146
    %v149 = vld [vmem:[#allocation7] sm:$0xf]
    %v150 = vld [vmem:[#allocation7 + $0x4] sm:$0xf]
    %v151 = vld [vmem:[#allocation7 + $0x8] sm:$0xf]
    %v152 = vld [vmem:[#allocation7 + $0xc] sm:$0xf]
    %v153 = vld [vmem:[#allocation7 + $0x10] sm:$0xf]
    %v154 = vld [vmem:[#allocation7 + $0x14] sm:$0xf]
    %v155 = vld [vmem:[#allocation7 + $0x18] sm:$0xf]
    %v156 = vld [vmem:[#allocation7 + $0x1c] sm:$0xf]
    %v157 = vld [vmem:[%s4] sm:$0x1]
    %v159 = vlaneseq
    %v160 = vshrl.u32 %v159, 7
    %v161 = vsub.s32 0, %v160
    %v162 = vrot.slane %v157, %v161
    %v172 = vunpack.c.l.b16 %v149
    %v173 = vunpack.c.l.b16 %v150
    %v174 = vunpack.c.l.b16 %v151
    %v175 = vunpack.c.l.b16 %v152
    %v176 = vunpack.c.l.b16 %v153
    %v177 = vunpack.c.l.b16 %v154
    %v178 = vunpack.c.l.b16 %v155
    %v179 = vunpack.c.l.b16 %v156
    %v180 = vpack.c.b16 %v173, %v172
    %v181 = vpack.c.b16 %v175, %v174
    %v182 = vpack.c.b16 %v177, %v176
    %v183 = vpack.c.b16 %v179, %v178
    %vm188 = vcmask 523264
    %v190 = vsel %vm188, %v148, 0
    %192 = vmatprep.subr.bf16.mxu0 0
    %193 = vmatpush1.bf16.msra.mxu0 0
    %194 = vmatprep.subr.bf16.mxu0 0
    %195 = vmatpush1.bf16.msra.mxu0 0
    %196 = vmatprep.subr.bf16.mxu0 0
    %197 = vmatpush1.bf16.msra.mxu0 0
    %198 = vmatprep.subr.bf16.mxu0 0
    %199 = vmatpush1.bf16.msra.mxu0 0
    %200 = vmatprep.subr.bf16.mxu0 0
    %201 = vmatpush1.bf16.msra.mxu0 %v183
    %202 = vmatprep.subr.bf16.mxu0 0
    %203 = vmatpush1.bf16.msra.mxu0 %v182
    %204 = vmatprep.subr.bf16.mxu0 0
    %205 = vmatpush1.bf16.msra.mxu0 %v181
    %206 = vmatprep.subr.bf16.mxu0 0
    %207 = vmatpush1.bf16.msra.mxu0 %v180
    %208 = vmatprep.subr.bf16.mxu0 0
    %209 = vmatpush2.bf16.msra.mxu0 0
    %210 = vmatprep.subr.bf16.mxu0 0
    %211 = vmatpush2.bf16.msra.mxu0 0
    %212 = vmatprep.subr.bf16.mxu0 0
    %213 = vmatpush2.bf16.msra.mxu0 0
    %214 = vmatprep.subr.bf16.mxu0 0
    %215 = vmatpush2.bf16.msra.mxu0 0
    %216 = vmatprep.subr.bf16.mxu0 0
    %217 = vmatpush2.bf16.msra.mxu0 0
    %218 = vmatprep.subr.bf16.mxu0 0
    %219 = vmatpush2.bf16.msra.mxu0 0
    %220 = vmatprep.subr.bf16.mxu0 0
    %221 = vmatpush2.bf16.msra.mxu0 0
    %222 = vmatprep.subr.bf16.mxu0 0
    %223 = vmatpush2.bf16.msra.mxu0 0
    %224 = vmatprep.mubr.bf16.mxu0 0
    %225 = vmatmul.mubr.bf16.gmra.mxu0 %v190
    %v226 = vpop.f32.mrf.mxu0
    %v227 = vadd.f32 %v162, %v226
    %v228 = vpop.f32.mrf.mxu0
    %v229 = vpop.f32.mrf.mxu0
    %v230 = vadd.f32 %v162, %v229
    %v231 = vpop.f32.mrf.mxu0
    %232 = vdwg.mxu0
    %v233 = vmax.f32 %v227, 0.0
    %v234 = vmax.f32 %v230, 0.0
    %v235 = vpack.c.bf16 %v234, %v233
    %v236 = vld [vmem:[%s5] sm:$0x3]
    %v237 = vld [vmem:[%s6] sm:$0xf]
    %239 = vset.pattern.permute.xlu0 0
    %240 = vperm.xlu0 %239, %v237
    %v241 = vpop.permute.xlu0 %240
    %v244 = vsel %vm188, %v236, 0
    %v247 = vsel %vm188, %v235, 0
    %249 = vmatprep.subr.bf16.mxu0 0
    %250 = vmatpush1.bf16.xpose.msra.mxu0 0
    %251 = vmatprep.subr.bf16.mxu0 0
    %252 = vmatpush1.bf16.xpose.msra.mxu0 0
    %253 = vmatprep.subr.bf16.mxu0 0
    %254 = vmatpush1.bf16.xpose.msra.mxu0 0
    %255 = vmatprep.subr.bf16.mxu0 0
    %256 = vmatpush1.bf16.xpose.msra.mxu0 0
    %257 = vmatprep.subr.bf16.mxu0 0
    %258 = vmatpush1.bf16.xpose.msra.mxu0 0
    %259 = vmatprep.subr.bf16.mxu0 0
    %260 = vmatpush1.bf16.xpose.msra.mxu0 0
    %261 = vmatprep.subr.bf16.mxu0 0
    %262 = vmatpush1.bf16.xpose.msra.mxu0 0
    %263 = vmatprep.subr.bf16.mxu0 0
    %264 = vmatpush1.bf16.xpose.msra.mxu0 %v247
    %265 = vmatprep.subr.bf16.mxu0 0
    %266 = vmatpush2.bf16.xpose.msra.mxu0 0
    %267 = vmatprep.subr.bf16.mxu0 0
    %268 = vmatpush2.bf16.xpose.msra.mxu0 0
    %269 = vmatprep.subr.bf16.mxu0 0
    %270 = vmatpush2.bf16.xpose.msra.mxu0 0
    %271 = vmatprep.subr.bf16.mxu0 0
    %272 = vmatpush2.bf16.xpose.msra.mxu0 0
    %273 = vmatprep.subr.bf16.mxu0 0
    %274 = vmatpush2.bf16.xpose.msra.mxu0 0
    %275 = vmatprep.subr.bf16.mxu0 0
    %276 = vmatpush2.bf16.xpose.msra.mxu0 0
    %277 = vmatprep.subr.bf16.mxu0 0
    %278 = vmatpush2.bf16.xpose.msra.mxu0 0
    %279 = vmatprep.subr.bf16.mxu0 0
    %280 = vmatpush2.bf16.xpose.msra.mxu0 0
    %281 = vmatprep.mubr.bf16.mxu0 0
    %282 = vmatmul.mubr.bf16.gmra.mxu0 %v244
    %v283 = vpop.f32.mrf.mxu0
    %v284 = vadd.f32 %v241, %v283
    %v285 = vpop.f32.mrf.mxu0
    %v286 = vpop.f32.mrf.mxu0
    %v287 = vpop.f32.mrf.mxu0
    %288 = vdwg.mxu0
    %vm289 = vcmask 125952
    %290 = vst.msk [vmem:[#allocation8] sm:$0xf] %vm289, %v284
    // Predicated region
    $region42: #{_multiclass_forward_p.1} parent=1 // pred_check
      _
    $region43: #{_multiclass_forward_p.1} parent=1 // pred_check_branch
      %292 = sbr.rel (0) target = $region45
    $region44: #{_multiclass_forward_p.1} parent=1 // pred_region
      %s294 = ssub.s32 64, 64
      %295 = vsyncadd [#allocation4], %s294
      %s297 = sshll.u32 [#allocation8], 4
      %s298 = int_to_ptr.vmem [resolvable:$true] %s297
      %300 = dma.vmem_to_hbm [thread:$0]  %s298, 64, %s7, [#allocation4]
    $region45: #{_multiclass_forward_p.1} parent=1 // pred_fallthru
      _
    // Predicated region
    $region46: #{_multiclass_forward_p.1} parent=1 // pred_check
      _
    $region47: #{_multiclass_forward_p.1} parent=1 // pred_check_branch
      %302 = sbr.rel (0) target = $region49
    $region48: #{_multiclass_forward_p.1} parent=1 // pred_region
      %303 = dma.done [#allocation4], 64
    $region49: #{_multiclass_forward_p.1} parent=1 // pred_fallthru
      _
    %304 = vsyncpa [#allocation3], 1
    %305 = vsyncpa [#allocation6], 1
    %306 = vsyncpa [#allocation4], 1

</llo_original>
